<compile_context>
chip_gen: v7x
topology: tpu7x:2x2x1
jax: 0.10.0
libtpu: 0.0.40
codegen_flags: <defaults>
</compile_context>

<pallas_src>
import math
from functools import partial

import jax
import jax.numpy as jnp
from jax.experimental import pallas as pl
from jax.experimental.pallas import tpu as pltpu


def build_pe_table(emb_dim: int, max_len: int) -> jnp.ndarray:
    """Sinusoidal position-encoding table, shape (max_len, 1, emb_dim)."""
    position = jnp.arange(max_len, dtype=jnp.float32)[:, None]                 # (L, 1)
    div_term = jnp.exp(
        jnp.arange(0, emb_dim, 2, dtype=jnp.float32) * (-math.log(10000.0) / emb_dim)
    )                                                                          # (E/2,)
    pe = jnp.zeros((max_len, emb_dim), dtype=jnp.float32)
    pe = pe.at[:, 0::2].set(jnp.sin(position * div_term))
    pe = pe.at[:, 1::2].set(jnp.cos(position * div_term))
    # .unsqueeze(0).transpose(0, 1) in torch -> (max_len, 1, emb_dim)
    return pe[:, None, :]


# ----------------------------- kernels --------------------------------------


def _add_pe_kernel(x_ref, pe_ref, o_ref):
    # x_ref: (tS, B, E), pe_ref: (tS, E) -> sublane broadcast over batch.
    o_ref[...] = x_ref[...] + pe_ref[...][:, None, :]


def _add_pe_dropout_kernel(x_ref, pe_ref, u_ref, o_ref, *, p, inv_keep):
    # Inverted dropout: keep with prob (1-p), scale kept values by 1/(1-p).
    y = x_ref[...] + pe_ref[...][:, None, :]
    keep = u_ref[...] >= jnp.float32(p)
    o_ref[...] = jnp.where(keep, y * jnp.float32(inv_keep), jnp.float32(0.0))


# ----------------------------- wrapper ---------------------------------------


def _choose_tile_rows(S, B, E, elem_bytes=4, target_tile_bytes=2 << 20):
    """Sequence rows per tile so one (tS, B, E) tile is ~<= 2 MiB.

    Small enough that double-buffered x / uniforms / out tiles stay under
    v5e's 16 MiB default scoped VMEM (and well under v7x's 64 MiB physical),
    large enough to sit near the HBM roofline for realistic B*E.
    """
    rows = target_tile_bytes // max(1, B * E * elem_bytes)
    if rows >= S:
        return S
    # tS is the second-to-last dim of the 2-D pe block -> keep it a multiple of 8.
    rows = max(8, (rows // 8) * 8)
    return min(rows, S)


def position_encoder_forward(x, pe_table, *, p: float, training: bool,
                             rng_key=None, tile_rows=None):
    """Pallas forward of PositionEncoder.

    x:        (S, B, E) float32
    pe_table: (max_len, 1, E) float32
    """
    S, B, E = x.shape
    pe2 = pe_table[:S, 0, :]                       # (S, E): size-1 batch dim squeezed
    apply_dropout = bool(training) and p > 0.0

    tS = tile_rows if tile_rows is not None else _choose_tile_rows(S, B, E)
    tS = min(int(tS), S)
    grid = (pl.cdiv(S, tS),)

    x_spec = pl.BlockSpec((tS, B, E), lambda i: (i, 0, 0))
    pe_spec = pl.BlockSpec((tS, E), lambda i: (i, 0))
    out_spec = pl.BlockSpec((tS, B, E), lambda i: (i, 0, 0))

    # Explicit VMEM budget: double-buffered streamed tiles + pe tile, 2x slack.
    n_stream = 3 if apply_dropout else 2           # x (+ uniforms) + out
    vmem_need = 2 * (n_stream * tS * B * E * 4 + tS * E * 4)
    compiler_params = pltpu.CompilerParams(
        dimension_semantics=("parallel",),         # independent tiles -> both v7x TCs
        vmem_limit_bytes=int(min(max(2 * vmem_need, 8 << 20), 32 << 20)),
    )

    out_shape = jax.ShapeDtypeStruct((S, B, E), x.dtype)

    if not apply_dropout:
        # NOTE: in a full model, eval mode is better left to XLA fusion of
        # `x + pe[:S]`; the Pallas path is kept here so the kernel is exercised.
        return pl.pallas_call(
            _add_pe_kernel,
            out_shape=out_shape,
            grid=grid,
            in_specs=[x_spec, pe_spec],
            out_specs=out_spec,
            compiler_params=compiler_params,
        )(x, pe2)

    if rng_key is None:
        rng_key = jax.random.PRNGKey(0)
    # Portable uniforms (works on TPU and in interpret mode); each grid tile
    # reads its own slice, so per-tile dropout masks are distinct.
    u = jax.random.uniform(rng_key, (S, B, E), dtype=jnp.float32)

    kernel = partial(_add_pe_dropout_kernel,
                     p=float(p), inv_keep=float(1.0 / (1.0 - p)))
    return pl.pallas_call(
        kernel,
        out_shape=out_shape,
        grid=grid,
        in_specs=[x_spec, pe_spec, x_spec],        # uniforms share x's blocking
        out_specs=out_spec,
        compiler_params=compiler_params,
    )(x, pe2, u)


# ----------------------------- demo / checks ---------------------------------


if __name__ == "__main__":
    EMB, MAX_LEN, P = 32, 50, 0.1
    key = jax.random.PRNGKey(0)
    k1, k2, k3 = jax.random.split(key, 3)
    pe_table = build_pe_table(EMB, MAX_LEN)
    scale = jnp.float32(1.0 / (1.0 - P))

    # --- Case 1: small shape, single tile ------------------------------------
    S1, B1 = 8, 2
    x1 = jax.random.normal(k1, (S1, B1, EMB), dtype=jnp.float32)
    ref1 = x1 + pe_table[:S1]

    y_eval = jax.block_until_ready(
        position_encoder_forward(x1, pe_table, p=P, training=False))
    assert jnp.allclose(y_eval, ref1, atol=1e-6), "eval mismatch (case 1)"

    y_train = jax.block_until_ready(
        position_encoder_forward(x1, pe_table, p=P, training=True, rng_key=k2))
    u1 = jax.random.uniform(k2, (S1, B1, EMB), dtype=jnp.float32)
    ref1_tr = jnp.where(u1 >= P, ref1 * scale, 0.0)
    assert jnp.allclose(y_train, ref1_tr, atol=1e-5), "train mismatch (case 1)"

    # --- Case 2: multi-tile grid (3 sequence tiles of 8 rows each) ------------
    S2, B2 = 24, 2
    x2 = jax.random.normal(k3, (S2, B2, EMB), dtype=jnp.float32)
    ref2 = x2 + pe_table[:S2]

    y2 = jax.block_until_ready(
        position_encoder_forward(x2, pe_table, p=P, training=False, tile_rows=8))
    assert jnp.allclose(y2, ref2, atol=1e-6), "eval mismatch (case 2, tiled)"

    y2_tr = jax.block_until_ready(
        position_encoder_forward(x2, pe_table, p=P, training=True,
                                 rng_key=k2, tile_rows=8))
    u2 = jax.random.uniform(k2, (S2, B2, EMB), dtype=jnp.float32)
    ref2_tr = jnp.where(u2 >= P, ref2 * scale, 0.0)
    assert jnp.allclose(y2_tr, ref2_tr, atol=1e-5), "train mismatch (case 2, tiled)"

    print("KERNEL_OK")
</pallas_src>

<mosaic_0001>
module attributes {stable_mosaic.version = 11 : i64} {
  func.func @_add_pe_kernel(%arg0: i32, %arg1: memref<8x2x32xf32, #tpu.memory_space<vmem>>, %arg2: memref<8x32xf32, #tpu.memory_space<vmem>>, %arg3: memref<8x2x32xf32, #tpu.memory_space<vmem>>) attributes {dimension_semantics = [#tpu.dimension_semantics<parallel>], iteration_bounds = array<i64: 1>, scalar_prefetch = 0 : i64, scratch_operands = 0 : i64, tpu.core_type = #tpu.core_type<tc>, window_params = [{transform_indices = @transform_0, window_bounds = array<i64: 8, 2, 32>}, {transform_indices = @transform_1, window_bounds = array<i64: 8, 32>}, {transform_indices = @transform_2, window_bounds = array<i64: 8, 2, 32>}]} {
    %c0 = arith.constant 0 : index
    %c0_0 = arith.constant 0 : index
    %c0_1 = arith.constant 0 : index
    %0 = vector.load %arg1[%c0, %c0_0, %c0_1] : memref<8x2x32xf32, #tpu.memory_space<vmem>>, vector<8x2x32xf32>
    %c0_2 = arith.constant 0 : index
    %c0_3 = arith.constant 0 : index
    %1 = vector.load %arg2[%c0_2, %c0_3] : memref<8x32xf32, #tpu.memory_space<vmem>>, vector<8x32xf32>
    %2 = vector.shape_cast %1 : vector<8x32xf32> to vector<8x1x32xf32>
    %3 = vector.broadcast %2 : vector<8x1x32xf32> to vector<8x2x32xf32>
    %4 = arith.addf %0, %3 : vector<8x2x32xf32>
    %c0_4 = arith.constant 0 : index
    %c0_5 = arith.constant 0 : index
    %c0_6 = arith.constant 0 : index
    %5 = vector.load %arg3[%c0_4, %c0_5, %c0_6] : memref<8x2x32xf32, #tpu.memory_space<vmem>>, vector<8x2x32xf32>
    tpu.vector_store %arg3[%c0_4, %c0_5, %c0_6], %4 {strides = array<i32>} : memref<8x2x32xf32, #tpu.memory_space<vmem>>, vector<8x2x32xf32>,
    return
  }
  func.func @transform_0(%arg0: i32) -> (i32, i32, i32) {
    %c0_i32 = arith.constant 0 : i32
    %c0_i32_0 = arith.constant 0 : i32
    %c0_i32_1 = arith.constant 0 : i32
    return %arg0, %c0_i32, %c0_i32_0 : i32, i32, i32
  }
  func.func @transform_1(%arg0: i32) -> (i32, i32) {
    %c0_i32 = arith.constant 0 : i32
    %c0_i32_0 = arith.constant 0 : i32
    return %arg0, %c0_i32 : i32, i32
  }
  func.func @transform_2(%arg0: i32) -> (i32, i32, i32) {
    %c0_i32 = arith.constant 0 : i32
    %c0_i32_0 = arith.constant 0 : i32
    %c0_i32_1 = arith.constant 0 : i32
    return %arg0, %c0_i32, %c0_i32_0 : i32, i32, i32
  }
}

</mosaic_0001>

<llo_original>
// kernel: tpu_custom_call.1
$region0: #{tpu_custom_call.1}
  #allocation0 [shape = 'u32[]', space=smem, size = 0x4, offset = 0x4, fixed_abs, tag = 'smem constant byte address 0x4 - core index']
  #allocation1 [shape = 'u32[144,128]{1,0:T(1,128)}', space=vmem, size = 0x12000, scoped, tag = 'internal scratch']
  %s0 = inlined_call_operand.hbm [shape: f32[8,2,32], index: 0, kind: input, shape index: {}]
  %s1 = inlined_call_operand.hbm [shape: f32[8,32], index: 1, kind: input, shape index: {}]
  %s2 = inlined_call_operand.hbm [shape: f32[8,2,32], index: 2, kind: output, shape index: {}]
  %s3 = sld [smem:[#allocation0]]
  $region26: #{tpu_custom_call.1} parent=0
    _
  %s5 = ssub.s32 1, %s3
  %s6 = scalar_select 0, %s5, %s3
  $region1: #{tpu_custom_call.1} parent=0
    #allocation2 [shape = 'u8[8192]{0}', space=vmem, size = 0x2000, scoped, tag = 'input window, operand 0, single buffered']
    #allocation3 [shape = 's32[1]{0}', space=sflag, size = 0x4, scoped, tag = 'scoped memory for tpu_custom_call.1']
    #allocation4 [shape = 's32[1]{0}', space=sflag, size = 0x4, scoped, tag = 'scoped memory for tpu_custom_call.1']
    #allocation5 [shape = 'u8[4096]{0}', space=vmem, size = 0x1000, scoped, tag = 'input window, operand 1, single buffered']
    #allocation6 [shape = 's32[1]{0}', space=sflag, size = 0x4, scoped, tag = 'scoped memory for tpu_custom_call.1']
    #allocation7 [shape = 'u8[8192]{0}', space=vmem, size = 0x2000, scoped, tag = 'output window, operand 0, single buffered']
    %7 = vsyncpa [#allocation3], 0
    %8 = vsyncpa [#allocation6], 0
    %9 = vsyncpa [#allocation4], 0
    // Predicated region
    $region2: #{tpu_custom_call.1} parent=1 // pred_check
      _
    $region3: #{tpu_custom_call.1} parent=1 // pred_check_branch
      %11 = sbr.rel (0) target = $region5
    $region4: #{tpu_custom_call.1} parent=1 // pred_region
      %s13 = ssub.s32 256, 256
      %14 = vsyncadd [#allocation3], %s13
      %s15 = sshll.u32 [#allocation2], 4
      %s16 = int_to_ptr.vmem [resolvable:$true] %s15
      %21 = dma.hbm_to_vmem [thread:$0]  %s0, 256, %s16, [#allocation3], 32, 32, 2
    $region5: #{tpu_custom_call.1} parent=1 // pred_fallthru
      _
    // Predicated region
    $region6: #{tpu_custom_call.1} parent=1 // pred_check
      _
    $region7: #{tpu_custom_call.1} parent=1 // pred_check_branch
      %23 = sbr.rel (0) target = $region9
    $region8: #{tpu_custom_call.1} parent=1 // pred_region
      %s25 = ssub.s32 128, 128
      %26 = vsyncadd [#allocation6], %s25
      %s28 = sshll.u32 [#allocation5], 4
      %s29 = int_to_ptr.vmem [resolvable:$true] %s28
      %31 = dma.hbm_to_vmem [thread:$0]  %s1, 128, %s29, [#allocation6]
    $region9: #{tpu_custom_call.1} parent=1 // pred_fallthru
      _
    // Predicated region
    $region10: #{tpu_custom_call.1} parent=1 // pred_check
      _
    $region11: #{tpu_custom_call.1} parent=1 // pred_check_branch
      %33 = sbr.rel (0) target = $region13
    $region12: #{tpu_custom_call.1} parent=1 // pred_region
      %34 = dma.done [#allocation3], 256
    $region13: #{tpu_custom_call.1} parent=1 // pred_fallthru
      _
    // Predicated region
    $region14: #{tpu_custom_call.1} parent=1 // pred_check
      _
    $region15: #{tpu_custom_call.1} parent=1 // pred_check_branch
      %36 = sbr.rel (0) target = $region17
    $region16: #{tpu_custom_call.1} parent=1 // pred_region
      %37 = dma.done [#allocation6], 128
    $region17: #{tpu_custom_call.1} parent=1 // pred_fallthru
      _
    %v38 = vld [vmem:[#allocation2] sm:$0x3]
    %v39 = vld [vmem:[#allocation2 + $0x2] sm:$0x3]
    %v40 = vld [vmem:[#allocation2 + $0x4] sm:$0x3]
    %v41 = vld [vmem:[#allocation2 + $0x6] sm:$0x3]
    %v42 = vld [vmem:[#allocation2 + $0x8] sm:$0x3]
    %v43 = vld [vmem:[#allocation2 + $0xa] sm:$0x3]
    %v44 = vld [vmem:[#allocation2 + $0xc] sm:$0x3]
    %v45 = vld [vmem:[#allocation2 + $0xe] sm:$0x3]
    %v46 = vld [vmem:[#allocation5] sm:$0xff]
    %v48 = vcombine.high %v46, %v46
    %v50 = vunpack.c.l.s4 1966171168
    %v51 = vunpack.c.0.s8 %v50
    %v52 = vlaneseq
    %v53 = vshrl.u32 %v52, 7
    %v54 = vsub.s32 %v51, %v53
    %v55 = vrot.slane %v46, %v54
    %v57 = vunpack.c.l.s4 1966171168
    %v58 = vunpack.c.0.s8 %v57
    %v59 = vlaneseq
    %v60 = vshrl.u32 %v59, 7
    %v61 = vsub.s32 %v58, %v60
    %v62 = vrot.slane %v48, %v61
    %v63 = vcombine.high %v55, %v55
    %v64 = vcombine.high %v62, %v62
    %v66 = vunpack.c.l.s4 1966171168
    %v67 = vunpack.c.0.s8 %v66
    %v68 = vlaneseq
    %v69 = vshrl.u32 %v68, 7
    %v70 = vsub.s32 %v67, %v69
    %v71 = vrot.slane %v55, %v70
    %v73 = vunpack.c.l.s4 1966171168
    %v74 = vunpack.c.0.s8 %v73
    %v75 = vlaneseq
    %v76 = vshrl.u32 %v75, 7
    %v77 = vsub.s32 %v74, %v76
    %v78 = vrot.slane %v62, %v77
    %v80 = vunpack.c.l.s4 1966171168
    %v81 = vunpack.c.0.s8 %v80
    %v82 = vlaneseq
    %v83 = vshrl.u32 %v82, 7
    %v84 = vsub.s32 %v81, %v83
    %v85 = vrot.slane %v63, %v84
    %v87 = vunpack.c.l.s4 1966171168
    %v88 = vunpack.c.0.s8 %v87
    %v89 = vlaneseq
    %v90 = vshrl.u32 %v89, 7
    %v91 = vsub.s32 %v88, %v90
    %v92 = vrot.slane %v64, %v91
    %v93 = vcombine.high %v71, %v71
    %v94 = vcombine.high %v78, %v78
    %v95 = vcombine.high %v85, %v85
    %v96 = vcombine.high %v92, %v92
    %v97 = vlaneseq
    %v98 = vshrl.u32 %v97, 7
    %v99 = vsub.s32 0, %v98
    %v100 = vrot.slane %v71, %v99
    %v101 = vlaneseq
    %v102 = vshrl.u32 %v101, 7
    %v103 = vsub.s32 0, %v102
    %v104 = vrot.slane %v85, %v103
    %v105 = vlaneseq
    %v106 = vshrl.u32 %v105, 7
    %v107 = vsub.s32 0, %v106
    %v108 = vrot.slane %v93, %v107
    %v109 = vlaneseq
    %v110 = vshrl.u32 %v109, 7
    %v111 = vsub.s32 0, %v110
    %v112 = vrot.slane %v95, %v111
    %v113 = vlaneseq
    %v114 = vshrl.u32 %v113, 7
    %v115 = vsub.s32 0, %v114
    %v116 = vrot.slane %v78, %v115
    %v117 = vlaneseq
    %v118 = vshrl.u32 %v117, 7
    %v119 = vsub.s32 0, %v118
    %v120 = vrot.slane %v92, %v119
    %v121 = vlaneseq
    %v122 = vshrl.u32 %v121, 7
    %v123 = vsub.s32 0, %v122
    %v124 = vrot.slane %v94, %v123
    %v125 = vlaneseq
    %v126 = vshrl.u32 %v125, 7
    %v127 = vsub.s32 0, %v126
    %v128 = vrot.slane %v96, %v127
    %v137 = vadd.f32 %v38, %v100
    %v138 = vadd.f32 %v39, %v104
    %v139 = vadd.f32 %v40, %v108
    %v140 = vadd.f32 %v41, %v112
    %v141 = vadd.f32 %v42, %v116
    %v142 = vadd.f32 %v43, %v120
    %v143 = vadd.f32 %v44, %v124
    %v144 = vadd.f32 %v45, %v128
    %vm145 = vcmask 254976
    %146 = vst.msk [vmem:[#allocation7] sm:$0x3] %vm145, %v137
    %147 = vst.msk [vmem:[#allocation7 + $0x2] sm:$0x3] %vm145, %v138
    %148 = vst.msk [vmem:[#allocation7 + $0x4] sm:$0x3] %vm145, %v139
    %149 = vst.msk [vmem:[#allocation7 + $0x6] sm:$0x3] %vm145, %v140
    %150 = vst.msk [vmem:[#allocation7 + $0x8] sm:$0x3] %vm145, %v141
    %151 = vst.msk [vmem:[#allocation7 + $0xa] sm:$0x3] %vm145, %v142
    %152 = vst.msk [vmem:[#allocation7 + $0xc] sm:$0x3] %vm145, %v143
    %153 = vst.msk [vmem:[#allocation7 + $0xe] sm:$0x3] %vm145, %v144
    // Predicated region
    $region18: #{tpu_custom_call.1} parent=1 // pred_check
      _
    $region19: #{tpu_custom_call.1} parent=1 // pred_check_branch
      %155 = sbr.rel (0) target = $region21
    $region20: #{tpu_custom_call.1} parent=1 // pred_region
      %s157 = ssub.s32 256, 256
      %158 = vsyncadd [#allocation4], %s157
      %s159 = sshll.u32 [#allocation7], 4
      %s160 = int_to_ptr.vmem [resolvable:$true] %s159
      %165 = dma.vmem_to_hbm [thread:$0]  %s160, 256, %s2, [#allocation4], 32, 32, 2
    $region21: #{tpu_custom_call.1} parent=1 // pred_fallthru
      _
    // Predicated region
    $region22: #{tpu_custom_call.1} parent=1 // pred_check
      _
    $region23: #{tpu_custom_call.1} parent=1 // pred_check_branch
      %167 = sbr.rel (0) target = $region25
    $region24: #{tpu_custom_call.1} parent=1 // pred_region
      %168 = dma.done [#allocation4], 256
    $region25: #{tpu_custom_call.1} parent=1 // pred_fallthru
      _
    %169 = vsyncpa [#allocation3], 1
    %170 = vsyncpa [#allocation6], 1
    %171 = vsyncpa [#allocation4], 1

</llo_original>
